<compile_context>
chip_gen: v6e
topology: v6e:2x2x1
jax: 0.10.0
libtpu: 0.0.40
codegen_flags: <defaults>
</compile_context>

<pallas_src>
import functools

import jax
import jax.numpy as jnp
from jax import lax
from jax.experimental import pallas as pl
from jax.experimental.pallas import tpu as pltpu

_VMEM_LIMIT = 32 * 1024 * 1024  # explicit scoped-VMEM limit (v5e default is only 16 MiB)


# ----------------------------------------------------------------------------
# Pallas kernel 1: weights-stationary GEMM + bias (+ optional tanh epilogue)
#   out[Cout, M] = W[Cout, K] @ cols[K, M] + bias[Cout]   (bf16 in, f32 acc/out)
# ----------------------------------------------------------------------------
def _matmul_bias_kernel(w_ref, c_ref, b_ref, o_ref, *, activation):
    acc = jnp.dot(w_ref[...], c_ref[...], preferred_element_type=jnp.float32)
    acc = acc + b_ref[...]
    if activation == "tanh":
        acc = jnp.tanh(acc)
    o_ref[...] = acc.astype(o_ref.dtype)


def matmul_bias_t(w2, cols, bias=None, *, activation=None, tm=1024):
    """w2: [Cout, K] (bf16), cols: [K, M] (bf16), bias: [Cout] or None -> [Cout, M] f32."""
    Cout, K = w2.shape
    K2, M = cols.shape
    assert K == K2
    if bias is None:
        bias = jnp.zeros((Cout,), jnp.float32)
    bias2 = bias.astype(jnp.float32).reshape(Cout, 1)

    # Lane-axis (M) tile: full extent when small (always legal), else a 128-multiple;
    # the ragged last tile is handled by the cdiv grid (OOB lanes never read back).
    tm_eff = M if M <= tm else tm
    grid_m = pl.cdiv(M, tm_eff)

    kern = functools.partial(_matmul_bias_kernel, activation=activation)
    return pl.pallas_call(
        kern,
        out_shape=jax.ShapeDtypeStruct((Cout, M), jnp.float32),
        grid=(grid_m,),
        in_specs=[
            pl.BlockSpec((Cout, K), lambda j: (0, 0)),      # weights: stationary, full-K
            pl.BlockSpec((K, tm_eff), lambda j: (0, j)),    # im2col column slab
            pl.BlockSpec((Cout, 1), lambda j: (0, 0)),      # bias
        ],
        out_specs=pl.BlockSpec((Cout, tm_eff), lambda j: (0, j)),
        compiler_params=pltpu.CompilerParams(
            dimension_semantics=("parallel",),
            vmem_limit_bytes=_VMEM_LIMIT),
    )(w2, cols, bias2)


# ----------------------------------------------------------------------------
# Pallas kernel 2: per-row normalization (+affine, +ReLU, +residual add)
#   InstanceNorm2d: rows = C*N, cols = H*W     (free reshape of CNHW)
#   BatchNorm2d   : rows = C,   cols = N*H*W   (free reshape of CNHW)
# ----------------------------------------------------------------------------
def _rownorm_kernel(*refs, eps, relu, has_res):
    if has_res:
        x_ref, g_ref, b_ref, r_ref, o_ref = refs
    else:
        x_ref, g_ref, b_ref, o_ref = refs
    x = x_ref[...].astype(jnp.float32)
    mean = jnp.mean(x, axis=-1, keepdims=True)
    xc = x - mean
    var = jnp.mean(xc * xc, axis=-1, keepdims=True)
    y = xc * lax.rsqrt(var + eps)
    y = y * g_ref[...] + b_ref[...]
    if relu:
        y = jnp.maximum(y, 0.0)
    if has_res:
        y = y + r_ref[...].astype(jnp.float32)
    o_ref[...] = y.astype(o_ref.dtype)


def row_normalize(x2, gamma, beta, *, eps=1e-5, relu=False, residual=None):
    """Row-wise mean/var normalization of a [R, L] slab, fused affine/ReLU/residual."""
    R, L = x2.shape
    # Tile rows (pipelined) when the slab is big; otherwise a single block.
    tr = 8 if (R % 8 == 0 and R > 8 and R * L * 4 > (2 << 20)) else R
    has_res = residual is not None
    kern = functools.partial(_rownorm_kernel, eps=eps, relu=relu, has_res=has_res)

    in_specs = [
        pl.BlockSpec((tr, L), lambda i: (i, 0)),
        pl.BlockSpec((tr, 1), lambda i: (i, 0)),
        pl.BlockSpec((tr, 1), lambda i: (i, 0)),
    ]
    args = [x2, gamma, beta]
    if has_res:
        in_specs.append(pl.BlockSpec((tr, L), lambda i: (i, 0)))
        args.append(residual)

    return pl.pallas_call(
        kern,
        out_shape=jax.ShapeDtypeStruct((R, L), jnp.float32),
        grid=(R // tr,),
        in_specs=in_specs,
        out_specs=pl.BlockSpec((tr, L), lambda i: (i, 0)),
        compiler_params=pltpu.CompilerParams(
            dimension_semantics=("parallel",),
            vmem_limit_bytes=_VMEM_LIMIT),
    )(*args)


# ----------------------------------------------------------------------------
# Conv wrappers (im2col glue in plain JAX, GEMM in Pallas) -- CNHW layout
# ----------------------------------------------------------------------------
def _im2col_cnhw(x, kh, kw, stride):
    """x: [C, N, H, W] -> cols [C*kh*kw, N*Ho*Wo] directly in K-major layout."""
    C, N, H, W = x.shape
    Ho = (H - kh) // stride + 1
    Wo = (W - kw) // stride + 1
    patches = []
    for ky in range(kh):
        for kx in range(kw):
            patches.append(x[:, :, ky:ky + stride * (Ho - 1) + 1:stride,
                                   kx:kx + stride * (Wo - 1) + 1:stride])
    cols = jnp.stack(patches, axis=1)                       # [C, kh*kw, N, Ho, Wo]
    # TODO(synk): gather the kh*kw strided row slices inside the Pallas kernel
    # (manual make_async_copy per M tile) to remove the kh*kw HBM amplification.
    return cols.reshape(C * kh * kw, N * Ho * Wo), Ho, Wo


def conv2d_cnhw(x, w, b=None, stride=1, activation=None):
    """x: [Cin, N, H, W]; w: [Cout, Cin, kh, kw] (PyTorch Conv2d layout); padding=0."""
    Cin, N, H, W = x.shape
    Cout, _, kh, kw = w.shape
    cols, Ho, Wo = _im2col_cnhw(x.astype(jnp.bfloat16), kh, kw, stride)
    w2 = w.reshape(Cout, Cin * kh * kw).astype(jnp.bfloat16)
    out = matmul_bias_t(w2, cols, b, activation=activation)   # [Cout, N*Ho*Wo]
    return out.reshape(Cout, N, Ho, Wo)


def conv_transpose2d_cnhw(x, w, stride=1, activation=None):
    """x: [Cin, N, H, W]; w: [Cin, Cout, kh, kw] (PyTorch ConvTranspose2d layout);
    padding=0, bias=False."""
    Cin, N, H, W = x.shape
    _, Cout, kh, kw = w.shape

    if stride == 1:
        xp = jnp.pad(x, ((0, 0), (0, 0), (kh - 1, kh - 1), (kw - 1, kw - 1)))
        wc = jnp.flip(w, axis=(2, 3)).transpose(1, 0, 2, 3)   # -> [Cout, Cin, kh, kw]
        return conv2d_cnhw(xp, wc, None, stride=1, activation=activation)

    # stride > 1: sub-pixel decomposition -- one small valid conv per output parity
    # class, instead of convolving a zero-dilated input (skips the structurally-zero work).
    s = stride
    Ho = (H - 1) * s + kh
    Wo = (W - 1) * s + kw
    y = jnp.zeros((Cout, N, Ho, Wo), jnp.float32)
    for ry in range(s):
        Qy = -(-(Ho - ry) // s)          # number of output rows with oy % s == ry
        for rx in range(s):
            Qx = -(-(Wo - rx) // s)
            w_sub = w[:, :, ry::s, rx::s]                    # [Cin, Cout, khr, kwr]
            khr, kwr = w_sub.shape[2], w_sub.shape[3]
            xp = jnp.pad(x, ((0, 0), (0, 0),
                             (khr - 1, Qy - H), (kwr - 1, Qx - W)))
            wc = jnp.flip(w_sub, axis=(2, 3)).transpose(1, 0, 2, 3)
            y_sub = conv2d_cnhw(xp, wc, None, stride=1, activation=activation)
            y = y.at[:, :, ry::s, rx::s].set(y_sub)
    return y


# ----------------------------------------------------------------------------
# Norm layers and ResnetBlock (CNHW layout)
# ----------------------------------------------------------------------------
def instance_norm_relu(x, relu=True, eps=1e-5):
    # InstanceNorm2d(affine=False): per-(n, c) stats over (H, W)
    C, N, H, W = x.shape
    x2 = x.reshape(C * N, H * W)
    g = jnp.ones((C * N, 1), jnp.float32)
    b = jnp.zeros((C * N, 1), jnp.float32)
    return row_normalize(x2, g, b, eps=eps, relu=relu).reshape(C, N, H, W)


def batch_norm(x, gamma, beta, relu=False, residual=None, eps=1e-5):
    # BatchNorm2d, module-default (training) mode: batch statistics over (N, H, W).
    # TODO(synk): for parity with a PyTorch model in eval() mode, feed running
    # mean/var instead of computing batch statistics.
    C, N, H, W = x.shape
    x2 = x.reshape(C, N * H * W)
    res2 = None if residual is None else residual.reshape(C, N * H * W)
    y = row_normalize(x2, gamma.reshape(C, 1), beta.reshape(C, 1),
                      eps=eps, relu=relu, residual=res2)
    return y.reshape(C, N, H, W)


def resnet_block(x, p):
    h = jnp.pad(x, ((0, 0), (0, 0), (1, 1), (1, 1)), mode='reflect')
    h = conv2d_cnhw(h, p['w1'], None, stride=1)
    h = batch_norm(h, p['g1'], p['b1'], relu=True)
    h = jnp.pad(h, ((0, 0), (0, 0), (1, 1), (1, 1)), mode='reflect')
    h = conv2d_cnhw(h, p['w2'], None, stride=1)
    return batch_norm(h, p['g2'], p['b2'], relu=False, residual=x)  # fused x + BN(.)


# ----------------------------------------------------------------------------
# Generator
# ----------------------------------------------------------------------------
def init_params(key, gen_input_nc, image_nc):
    keys = iter(jax.random.split(key, 64))

    def conv_w(cout, cin, k):
        return jax.random.normal(next(keys), (cout, cin, k, k), jnp.float32) * 0.05

    def convt_w(cin, cout, k):
        return jax.random.normal(next(keys), (cin, cout, k, k), jnp.float32) * 0.05

    def bias(c):
        return jax.random.normal(next(keys), (c,), jnp.float32) * 0.05

    enc = [
        (conv_w(8, gen_input_nc, 7), bias(8), 1),
        (conv_w(16, 8, 5), bias(16), 2),
        (conv_w(32, 16, 5), bias(32), 2),
        (conv_w(64, 32, 5), bias(64), 2),
        (conv_w(64, 64, 5), bias(64), 1),
        (conv_w(64, 64, 5), bias(64), 1),
        (conv_w(64, 64, 5), bias(64), 1),
    ]
    res = []
    for _ in range(4):
        res.append(dict(
            w1=conv_w(64, 64, 3), g1=jnp.ones((64,), jnp.float32), b1=jnp.zeros((64,), jnp.float32),
            w2=conv_w(64, 64, 3), g2=jnp.ones((64,), jnp.float32), b2=jnp.zeros((64,), jnp.float32),
        ))
    dec = [
        (convt_w(64, 64, 5), 1),
        (convt_w(64, 64, 5), 1),
        (convt_w(64, 64, 5), 1),
        (convt_w(64, 32, 5), 2),
        (convt_w(32, 16, 5), 2),
        (convt_w(16, 8, 5), 2),
        (convt_w(8, image_nc, 7), 1),
    ]
    return dict(enc=enc, res=res, dec=dec)


def generator_forward(params, x_nchw):
    x = x_nchw.transpose(1, 0, 2, 3)                   # NCHW -> CNHW (internal layout)
    # encoder: Conv2d -> InstanceNorm2d -> ReLU (x7)
    for (w, b, s) in params['enc']:
        x = conv2d_cnhw(x, w, b, stride=s)
        x = instance_norm_relu(x, relu=True)
    # bottleneck: 4 x ResnetBlock(64)
    for p in params['res']:
        x = resnet_block(x, p)
    # decoder: ConvTranspose2d -> InstanceNorm2d -> ReLU (x6), last ConvT -> Tanh (fused)
    dec = params['dec']
    for i, (w, s) in enumerate(dec):
        last = (i == len(dec) - 1)
        x = conv_transpose2d_cnhw(x, w, stride=s, activation="tanh" if last else None)
        if not last:
            x = instance_norm_relu(x, relu=True)
    return x.transpose(1, 0, 2, 3)                     # CNHW -> NCHW


# ----------------------------------------------------------------------------
# Small self-checks of the lowerings against XLA references (loose bf16 tolerance)
# ----------------------------------------------------------------------------
def _self_test(key):
    k1, k2, k3, k4 = jax.random.split(key, 4)

    # conv2d (stride 2) vs lax.conv_general_dilated
    N, Cin, Cout, H, k, s = 2, 4, 8, 11, 5, 2
    x = jax.random.normal(k1, (N, Cin, H, H), jnp.float32)
    w = jax.random.normal(k2, (Cout, Cin, k, k), jnp.float32) * 0.05
    got = conv2d_cnhw(x.transpose(1, 0, 2, 3), w, None, stride=s).transpose(1, 0, 2, 3)
    ref = lax.conv_general_dilated(x, w, (s, s), 'VALID',
                                   dimension_numbers=('NCHW', 'OIHW', 'NCHW'))
    assert float(jnp.max(jnp.abs(got - ref))) < 3e-2

    # stride-2 ConvTranspose2d (sub-pixel path) vs lhs-dilated conv reference
    Cin, Cout, H, k, s = 4, 6, 7, 5, 2
    x = jax.random.normal(k3, (N, Cin, H, H), jnp.float32)
    w = jax.random.normal(k4, (Cin, Cout, k, k), jnp.float32) * 0.05
    got = conv_transpose2d_cnhw(x.transpose(1, 0, 2, 3), w, stride=s).transpose(1, 0, 2, 3)
    wt = jnp.flip(w, axis=(2, 3)).transpose(1, 0, 2, 3)
    ref = lax.conv_general_dilated(x, wt, (1, 1),
                                   padding=((k - 1, k - 1), (k - 1, k - 1)),
                                   lhs_dilation=(s, s),
                                   dimension_numbers=('NCHW', 'OIHW', 'NCHW'))
    assert float(jnp.max(jnp.abs(got - ref))) < 3e-2


if __name__ == "__main__":
    key = jax.random.PRNGKey(0)
    kp, kx, kc = jax.random.split(key, 3)
    gen_input_nc, image_nc = 3, 3
    # 139x139 is the smallest spatial size the 7-conv valid encoder supports (2x2 bottleneck)
    N, H, W = 1, 139, 139

    params = init_params(kp, gen_input_nc, image_nc)
    x = jax.random.normal(kx, (N, gen_input_nc, H, W), jnp.float32)

    _self_test(kc)

    fwd = jax.jit(functools.partial(generator_forward, params))
    y = jax.block_until_ready(fwd(x))

    assert y.shape == (N, image_nc, H, W), y.shape
    assert bool(jnp.all(jnp.isfinite(y)))
    assert bool(jnp.all(jnp.abs(y) <= 1.0 + 1e-6))   # tanh output range
    print("KERNEL_OK")
</pallas_src>

<mosaic_0001>
module attributes {stable_mosaic.version = 11 : i64} {
  func.func @_matmul_bias_kernel(%arg0: i32, %arg1: memref<8x100xbf16, #tpu.memory_space<vmem>>, %arg2: memref<100x32xbf16, #tpu.memory_space<vmem>>, %arg3: memref<8x1xf32, #tpu.memory_space<vmem>>, %arg4: memref<8x32xf32, #tpu.memory_space<vmem>>) attributes {dimension_semantics = [#tpu.dimension_semantics<parallel>], iteration_bounds = array<i64: 1>, scalar_prefetch = 0 : i64, scratch_operands = 0 : i64, tpu.core_type = #tpu.core_type<tc>, window_params = [{pipeline_mode = #tpu.pipeline_mode<synchronous>, transform_indices = @transform_0, window_bounds = array<i64: 8, 100>}, {transform_indices = @transform_1, window_bounds = array<i64: 100, 32>}, {pipeline_mode = #tpu.pipeline_mode<synchronous>, transform_indices = @transform_2, window_bounds = array<i64: 8, 1>}, {transform_indices = @transform_3, window_bounds = array<i64: 8, 32>}]} {
    %c0 = arith.constant 0 : index
    %c0_0 = arith.constant 0 : index
    %0 = vector.load %arg1[%c0, %c0_0] : memref<8x100xbf16, #tpu.memory_space<vmem>>, vector<8x100xbf16>
    %c0_1 = arith.constant 0 : index
    %c0_2 = arith.constant 0 : index
    %1 = vector.load %arg2[%c0_1, %c0_2] : memref<100x32xbf16, #tpu.memory_space<vmem>>, vector<100x32xbf16>
    %cst = arith.constant dense<0.000000e+00> : vector<8x32xf32>
    %2 = tpu.matmul %0, %1, %cst {dimension_numbers = #tpu.dot_dimension_numbers<[1], [0], [0], [1], [0, 0, 1, 1], [], []>} : vector<8x100xbf16>, vector<100x32xbf16>, vector<8x32xf32> -> vector<8x32xf32>
    %c0_3 = arith.constant 0 : index
    %c0_4 = arith.constant 0 : index
    %3 = vector.load %arg3[%c0_3, %c0_4] : memref<8x1xf32, #tpu.memory_space<vmem>>, vector<8x1xf32>
    %4 = vector.broadcast %3 : vector<8x1xf32> to vector<8x32xf32>
    %5 = arith.addf %2, %4 : vector<8x32xf32>
    %c0_5 = arith.constant 0 : index
    %c0_6 = arith.constant 0 : index
    %6 = vector.load %arg4[%c0_5, %c0_6] : memref<8x32xf32, #tpu.memory_space<vmem>>, vector<8x32xf32>
    tpu.vector_store %arg4[%c0_5, %c0_6], %5 {strides = array<i32>} : memref<8x32xf32, #tpu.memory_space<vmem>>, vector<8x32xf32>,
    return
  }
  func.func @transform_0(%arg0: i32) -> (i32, i32) {
    %c0_i32 = arith.constant 0 : i32
    %c0_i32_0 = arith.constant 0 : i32
    %c0_i32_1 = arith.constant 0 : i32
    return %c0_i32, %c0_i32_0 : i32, i32
  }
  func.func @transform_1(%arg0: i32) -> (i32, i32) {
    %c0_i32 = arith.constant 0 : i32
    %c0_i32_0 = arith.constant 0 : i32
    return %c0_i32, %arg0 : i32, i32
  }
  func.func @transform_2(%arg0: i32) -> (i32, i32) {
    %c0_i32 = arith.constant 0 : i32
    %c0_i32_0 = arith.constant 0 : i32
    %c0_i32_1 = arith.constant 0 : i32
    return %c0_i32, %c0_i32_0 : i32, i32
  }
  func.func @transform_3(%arg0: i32) -> (i32, i32) {
    %c0_i32 = arith.constant 0 : i32
    %c0_i32_0 = arith.constant 0 : i32
    return %c0_i32, %arg0 : i32, i32
  }
}

</mosaic_0001>

<llo_original>
// kernel: tpu_custom_call.1
$region0: #{tpu_custom_call.1}
  #allocation0 [shape = 'u32[]', space=smem, size = 0x4, offset = 0x4, fixed_abs, tag = 'smem constant byte address 0x4 - core index']
  #allocation1 [shape = 'u32[144,128]{1,0:T(1,128)}', space=vmem, size = 0x12000, scoped, tag = 'internal scratch']
  %s0 = inlined_call_operand.vmem [shape: bf16[8,100], index: 0, kind: input, shape index: {}]
  %s1 = inlined_call_operand.vmem [shape: bf16[100,32], index: 1, kind: input, shape index: {}]
  %s2 = inlined_call_operand.vmem [shape: f32[8,1], index: 2, kind: input, shape index: {}]
  %s3 = inlined_call_operand.hbm [shape: f32[8,32], index: 3, kind: output, shape index: {}]
  %s4 = sld [smem:[#allocation0]]
  $region22: #{tpu_custom_call.1} parent=0
    _
  %s6 = ssub.s32 1, %s4
  %s7 = scalar_select 0, %s6, %s4
  $region1: #{tpu_custom_call.1} parent=0
    #allocation2 [shape = 'u8[4096]{0}', space=vmem, size = 0x1000, scoped, tag = 'output window, operand 0, single buffered']
    #allocation3 [shape = 's32[1]{0}', space=sflag, size = 0x4, scoped, tag = 'scoped memory for tpu_custom_call.1']
    %8 = vsyncpa [#allocation3], 0
    // Predicated region
    $region2: #{tpu_custom_call.1} parent=1 // pred_check
      _
    $region3: #{tpu_custom_call.1} parent=1 // pred_check_branch
      %10 = sbr.rel (0) target = $region5
    $region4: #{tpu_custom_call.1} parent=1 // pred_region
      _
    $region5: #{tpu_custom_call.1} parent=1 // pred_fallthru
      _
    // Predicated region
    $region6: #{tpu_custom_call.1} parent=1 // pred_check
      _
    $region7: #{tpu_custom_call.1} parent=1 // pred_check_branch
      %12 = sbr.rel (0) target = $region9
    $region8: #{tpu_custom_call.1} parent=1 // pred_region
      _
    $region9: #{tpu_custom_call.1} parent=1 // pred_fallthru
      _
    // Predicated region
    $region10: #{tpu_custom_call.1} parent=1 // pred_check
      _
    $region11: #{tpu_custom_call.1} parent=1 // pred_check_branch
      %14 = sbr.rel (0) target = $region13
    $region12: #{tpu_custom_call.1} parent=1 // pred_region
      _
    $region13: #{tpu_custom_call.1} parent=1 // pred_fallthru
      _
    %v16 = vld [vmem:[%s0] sm:$0xf]
    %v17 = vld [vmem:[%s1] sm:$0xf]
    %v18 = vld [vmem:[%s1 + $0x4] sm:$0xf]
    %v19 = vld [vmem:[%s1 + $0x8] sm:$0xf]
    %v20 = vld [vmem:[%s1 + $0xc] sm:$0xf]
    %v21 = vld [vmem:[%s1 + $0x10] sm:$0xf]
    %v22 = vld [vmem:[%s1 + $0x14] sm:$0xf]
    %v23 = vld [vmem:[%s1 + $0x18] sm:$0xf]
    %v24 = vld [vmem:[%s1 + $0x1c] sm:$0xf]
    %v25 = vld [vmem:[%s1 + $0x20] sm:$0xf]
    %v26 = vld [vmem:[%s1 + $0x24] sm:$0xf]
    %v27 = vld [vmem:[%s1 + $0x28] sm:$0xf]
    %v28 = vld [vmem:[%s1 + $0x2c] sm:$0xf]
    %v29 = vld [vmem:[%s1 + $0x30] sm:$0x3]
    %v30 = vld [vmem:[%s2] sm:$0xff]
    %32 = vset.pattern.permute.xlu0 0
    %33 = vperm.xlu0 %32, %v30
    %v34 = vpop.permute.xlu0 %33
    %v49 = vunpack.c.l.b16 %v17
    %v50 = vunpack.c.l.b16 %v18
    %v51 = vunpack.c.l.b16 %v19
    %v52 = vunpack.c.l.b16 %v20
    %v53 = vunpack.c.l.b16 %v21
    %v54 = vunpack.c.l.b16 %v22
    %v55 = vunpack.c.l.b16 %v23
    %v56 = vunpack.c.l.b16 %v24
    %v57 = vunpack.c.l.b16 %v25
    %v58 = vunpack.c.l.b16 %v26
    %v59 = vunpack.c.l.b16 %v27
    %v60 = vunpack.c.l.b16 %v28
    %v61 = vunpack.c.l.b16 %v29
    %v62 = vpack.c.b16 %v50, %v49
    %v63 = vpack.c.b16 %v52, %v51
    %v64 = vpack.c.b16 %v54, %v53
    %v65 = vpack.c.b16 %v56, %v55
    %v66 = vpack.c.b16 %v58, %v57
    %v67 = vpack.c.b16 %v60, %v59
    %v68 = vpack.c.b16 %v61, %v61
    %vm75 = vcmask 818176
    %v77 = vsel %vm75, %v16, 0
    %vm79 = vcmask 1041408
    %v81 = vsel %vm79, %v68, 0
    %83 = vmatprep.subr.bf16.mxu0 0
    %84 = vmatpush1.bf16.msra.mxu0 0
    %85 = vmatprep.subr.bf16.mxu0 0
    %86 = vmatpush1.bf16.msra.mxu0 %v81
    %87 = vmatprep.subr.bf16.mxu0 0
    %88 = vmatpush1.bf16.msra.mxu0 %v67
    %89 = vmatprep.subr.bf16.mxu0 0
    %90 = vmatpush1.bf16.msra.mxu0 %v66
    %91 = vmatprep.subr.bf16.mxu0 0
    %92 = vmatpush1.bf16.msra.mxu0 %v65
    %93 = vmatprep.subr.bf16.mxu0 0
    %94 = vmatpush1.bf16.msra.mxu0 %v64
    %95 = vmatprep.subr.bf16.mxu0 0
    %96 = vmatpush1.bf16.msra.mxu0 %v63
    %97 = vmatprep.subr.bf16.mxu0 0
    %98 = vmatpush1.bf16.msra.mxu0 %v62
    %99 = vmatprep.subr.bf16.mxu0 0
    %100 = vmatpush2.bf16.msra.mxu0 0
    %101 = vmatprep.subr.bf16.mxu0 0
    %102 = vmatpush2.bf16.msra.mxu0 0
    %103 = vmatprep.subr.bf16.mxu0 0
    %104 = vmatpush2.bf16.msra.mxu0 0
    %105 = vmatprep.subr.bf16.mxu0 0
    %106 = vmatpush2.bf16.msra.mxu0 0
    %107 = vmatprep.subr.bf16.mxu0 0
    %108 = vmatpush2.bf16.msra.mxu0 0
    %109 = vmatprep.subr.bf16.mxu0 0
    %110 = vmatpush2.bf16.msra.mxu0 0
    %111 = vmatprep.subr.bf16.mxu0 0
    %112 = vmatpush2.bf16.msra.mxu0 0
    %113 = vmatprep.subr.bf16.mxu0 0
    %114 = vmatpush2.bf16.msra.mxu0 0
    %115 = vmatprep.mubr.bf16.mxu0 0
    %116 = vmatmul.mubr.bf16.gmra.mxu0 %v77
    %v117 = vpop.f32.mrf.mxu0
    %v118 = vadd.f32 %v34, %v117
    %v119 = vpop.f32.mrf.mxu0
    %v120 = vpop.f32.mrf.mxu0
    %v121 = vpop.f32.mrf.mxu0
    %122 = vdwg.mxu0
    %vm123 = vcmask 261120
    %124 = vst.msk [vmem:[#allocation2] sm:$0xff] %vm123, %v118
    // Predicated region
    $region14: #{tpu_custom_call.1} parent=1 // pred_check
      _
    $region15: #{tpu_custom_call.1} parent=1 // pred_check_branch
      %126 = sbr.rel (0) target = $region17
    $region16: #{tpu_custom_call.1} parent=1 // pred_region
      %s128 = ssub.s32 128, 128
      %129 = vsyncadd [#allocation3], %s128
      %s131 = sshll.u32 [#allocation2], 4
      %s132 = int_to_ptr.vmem [resolvable:$true] %s131
      %134 = dma.vmem_to_hbm [thread:$0]  %s132, 128, %s3, [#allocation3]
    $region17: #{tpu_custom_call.1} parent=1 // pred_fallthru
      _
    // Predicated region
    $region18: #{tpu_custom_call.1} parent=1 // pred_check
      _
    $region19: #{tpu_custom_call.1} parent=1 // pred_check_branch
      %136 = sbr.rel (0) target = $region21
    $region20: #{tpu_custom_call.1} parent=1 // pred_region
      %137 = dma.done [#allocation3], 128
    $region21: #{tpu_custom_call.1} parent=1 // pred_fallthru
      _
    %138 = vsyncpa [#allocation3], 1

</llo_original>
